<compile_context>
chip_gen: v7x
topology: tpu7x:2x2x1
jax: 0.10.0
libtpu: 0.0.40
codegen_flags: <defaults>
</compile_context>

<pallas_src>
import jax
import jax.numpy as jnp
from jax import lax
from jax.experimental import pallas as pl
from jax.experimental.pallas import tpu as pltpu

NEG_SLOPE = 0.01  # F.leaky_relu default negative_slope


def attention_kernel(x_ref, keys_ref, vals_ref, lens_ref,
                     wq_ref, wmh_ref, wmc_ref, wp_ref,
                     bq_ref, bm_ref, bp_ref, out_ref):
    """One batch tile per grid step; weights stay resident across steps.

    x    : (Bt, H)       decoder hidden state tile
    keys : (L, Bt, K)    encoder keys, NATIVE (L, B, K) layout
    vals : (L, Bt, V)    encoder values, NATIVE (L, B, V) layout
    lens : (1, Bt) i32   per-batch valid length (positions >= len are masked)
    wq   : (H, K)        linear_query.weight.T
    wmh  : (H, K)        mlp_layer.weight.T[:H]
    wmc  : (V, K)        mlp_layer.weight.T[H:]
    wp   : (K, O)        projection.weight.T
    bq   : (1, K), bm : (1, K), bp : (1, O)
    out  : (Bt, OUT_W)   [context | logits | zero-pad]  lane-dense slab
    """
    x = x_ref[...]                       # (Bt, H)
    keys = keys_ref[...]                 # (L, Bt, K)
    vals = vals_ref[...]                 # (L, Bt, V)
    L = keys.shape[0]
    Bt = x.shape[0]

    # ---- MXU: the weight matmuls (the only ones with decent row utilization)
    q = jnp.dot(x, wq_ref[...], preferred_element_type=jnp.float32) + bq_ref[...]      # (Bt, K)
    mlp_x = jnp.dot(x, wmh_ref[...], preferred_element_type=jnp.float32) + bm_ref[...]  # (Bt, K)

    # ---- scores[l, b] = sum_k q[b, k] * keys[l, b, k]
    # VPU broadcast-multiply + lane reduce, reading keys in native layout
    # (no wrapper transpose, no batched M=1 MXU pushes).
    scores = jnp.sum(q[None, :, :] * keys, axis=-1)            # (L, Bt) f32

    # ---- mask: positions l >= valid_len[b] -> -inf (fully-masked rows yield
    # NaN, exactly matching PyTorch softmax over an all -inf row).
    pos = lax.broadcasted_iota(jnp.int32, (L, Bt), 0)          # (L, Bt)
    scores = jnp.where(pos >= lens_ref[...], -jnp.inf, scores)

    # ---- softmax over L (axis 0), kept in f32; exact reciprocal on the EUP.
    m = jnp.max(scores, axis=0, keepdims=True)                 # (1, Bt)
    e = jnp.exp(scores - m)                                    # (L, Bt)
    denom = jnp.sum(e, axis=0, keepdims=True)                  # (1, Bt)
    w = e * pl.reciprocal(denom)                               # (L, Bt)

    # ---- context[b, v] = sum_l w[l, b] * vals[l, b, v]
    # L vreg-adds on the VALU; vals read in native layout.
    ctx = jnp.sum(w[:, :, None] * vals, axis=0)                # (Bt, V)

    # ---- mlp_layer(concat(x, ctx)) == x@Wm[:H] + ctx@Wm[H:] + bm
    mlp = mlp_x + jnp.dot(ctx, wmc_ref[...], preferred_element_type=jnp.float32)   # (Bt, K)
    act = jnp.where(mlp >= 0, mlp, NEG_SLOPE * mlp)            # leaky_relu
    logits = jnp.dot(act, wp_ref[...], preferred_element_type=jnp.float32) + bp_ref[...]  # (Bt, O)

    # ---- single lane-dense (multiple-of-128) writeback
    V = ctx.shape[1]
    O = logits.shape[1]
    pad = out_ref.shape[1] - V - O
    pieces = [ctx, logits]
    if pad > 0:
        pieces.append(jnp.zeros((Bt, pad), jnp.float32))
    out_ref[...] = jnp.concatenate(pieces, axis=-1).astype(out_ref.dtype)


def _pick_batch_tile(B):
    # v6e: 256-row tiles fill the 2x256 MXU; v5e/v7x: 128 is plenty (v7x has
    # half the VMEM of v6e). Fall back to whole-B when it does not tile evenly
    # (e.g. the tiny test shapes).  TODO(synk): pad B instead of falling back.
    if B % 256 == 0:
        return 256
    if B % 128 == 0:
        return 128
    return B


def attention_forward(outputs, encoder_keys, encoder_values, valid_len, params):
    """outputs: (B,H); encoder_keys: (L,B,K); encoder_values: (L,B,V);
    valid_len: (B,) int (positions >= valid_len[b] are masked, i.e. the usual
    padding mask). Returns (context (B,V), logits (B,O)) matching
    Attention.forward."""
    B, H = outputs.shape
    L, _, K = encoder_keys.shape
    V = encoder_values.shape[2]
    O = params["wp"].shape[0]

    Bt = _pick_batch_tile(B)
    nb = B // Bt
    OUT_W = ((V + O + 127) // 128) * 128     # lane-dense packed output width

    # Weight prep (done once at parameter-load time in a real model).
    wq_t = params["wq"].T                    # (H, K)
    wm_t = params["wm"].T                    # (H+V, K)
    wmh, wmc = wm_t[:H], wm_t[H:]            # (H, K), (V, K)
    wp_t = params["wp"].T                    # (K, O)
    bq = params["bq"].reshape(1, K)
    bm = params["bm"].reshape(1, K)
    bp = params["bp"].reshape(1, O)
    lens = valid_len.astype(jnp.int32).reshape(1, B)

    const2 = lambda b: (0, 0)                # weights/biases stay VMEM-resident

    grid_spec = pltpu.PrefetchScalarGridSpec(
        num_scalar_prefetch=0,
        grid=(nb,),
        in_specs=[
            pl.BlockSpec((Bt, H), lambda b: (b, 0)),        # x
            pl.BlockSpec((L, Bt, K), lambda b: (0, b, 0)),  # keys (native layout)
            pl.BlockSpec((L, Bt, V), lambda b: (0, b, 0)),  # values (native layout)
            pl.BlockSpec((1, Bt), lambda b: (0, b)),        # valid lengths
            pl.BlockSpec((H, K), const2),                   # wq_t
            pl.BlockSpec((H, K), const2),                   # wmh
            pl.BlockSpec((V, K), const2),                   # wmc
            pl.BlockSpec((K, O), const2),                   # wp_t
            pl.BlockSpec((1, K), const2),                   # bq
            pl.BlockSpec((1, K), const2),                   # bm
            pl.BlockSpec((1, O), const2),                   # bp
        ],
        out_specs=pl.BlockSpec((Bt, OUT_W), lambda b: (b, 0)),
    )

    flops = 2 * B * (2 * H * K + K * L + L * V + V * K + K * O)
    bytes_accessed = 4 * (B * H + L * B * (K + V) + B
                          + 2 * H * K + V * K + K * O + 2 * K + O
                          + B * OUT_W)
    cost = pl.CostEstimate(flops=flops, transcendentals=B * L,
                           bytes_accessed=bytes_accessed)

    packed = pl.pallas_call(
        attention_kernel,
        grid_spec=grid_spec,
        out_shape=jax.ShapeDtypeStruct((B, OUT_W), jnp.float32),
        compiler_params=pltpu.CompilerParams(
            dimension_semantics=("parallel",)),   # megacore / 2-TC sharding on v7x
        cost_estimate=cost,
    )(outputs, encoder_keys, encoder_values, lens,
      wq_t, wmh, wmc, wp_t, bq, bm, bp)

    return packed[:, :V], packed[:, V:V + O]


def attention_reference(outputs, encoder_keys, encoder_values, mask, params):
    """Pure-JAX mirror of the PyTorch forward, for correctness checking."""
    out3 = outputs[:, None, :]                                   # (B,1,H)
    query = out3 @ params["wq"].T + params["bq"]                 # (B,1,K)
    keys = jnp.transpose(encoder_keys, (1, 2, 0))                # (B,K,L)
    vals = jnp.transpose(encoder_values, (1, 0, 2))              # (B,L,V)
    att = jnp.einsum("bik,bkl->bil", query, keys)                # (B,1,L)
    att = jnp.where(mask, -jnp.inf, att)
    w = jax.nn.softmax(att, axis=-1)
    ctx = jnp.einsum("bil,blv->biv", w, vals)                    # (B,1,V)
    comb = jnp.concatenate([out3, ctx], axis=2)
    mlp = comb @ params["wm"].T + params["bm"]
    act = jnp.where(mlp >= 0, mlp, NEG_SLOPE * mlp)
    logits = act @ params["wp"].T + params["bp"]
    return ctx[:, 0, :], logits[:, 0, :]


if __name__ == "__main__":
    B, H, K, V, O, L = 2, 32, 16, 16, 8, 8   # batch, hidden, key, value, output, seq

    key = jax.random.PRNGKey(0)
    ks = jax.random.split(key, 9)
    outputs = jax.random.normal(ks[0], (B, H), jnp.float32)
    encoder_keys = jax.random.normal(ks[1], (L, B, K), jnp.float32)
    encoder_values = jax.random.normal(ks[2], (L, B, V), jnp.float32)

    # deterministic synthetic parameters (nn.Linear weight shapes: (out, in))
    params = {
        "wq": 0.1 * jax.random.normal(ks[3], (K, H), jnp.float32),
        "bq": 0.1 * jax.random.normal(ks[4], (K,), jnp.float32),
        "wm": 0.1 * jax.random.normal(ks[5], (K, H + V), jnp.float32),
        "bm": 0.1 * jax.random.normal(ks[6], (K,), jnp.float32),
        "wp": 0.1 * jax.random.normal(ks[7], (O, K), jnp.float32),
        "bp": 0.1 * jax.random.normal(ks[8], (O,), jnp.float32),
    }

    # padding mask specified as per-batch valid lengths (positions >= len masked)
    valid_len = jnp.array([L, 5], dtype=jnp.int32)
    mask = jnp.arange(L)[None, None, :] >= valid_len[:, None, None]   # (B,1,L) bool

    ctx, logits = attention_forward(outputs, encoder_keys, encoder_values,
                                    valid_len, params)
    jax.block_until_ready((ctx, logits))

    ctx_ref, logits_ref = attention_reference(outputs, encoder_keys,
                                              encoder_values, mask, params)
    assert ctx.shape == (B, V) and logits.shape == (B, O)
    # Tolerance covers MXU vs. default-precision XLA matmul rounding differences.
    assert jnp.allclose(ctx, ctx_ref, atol=5e-3, rtol=5e-3)
    assert jnp.allclose(logits, logits_ref, atol=5e-3, rtol=5e-3)
    print("KERNEL_OK")
</pallas_src>

<mosaic_0001>
module attributes {stable_mosaic.version = 11 : i64} {
  func.func @attention_kernel(%arg0: i32, %arg1: memref<2x32xf32, #tpu.memory_space<vmem>>, %arg2: memref<8x2x16xf32, #tpu.memory_space<vmem>>, %arg3: memref<8x2x16xf32, #tpu.memory_space<vmem>>, %arg4: memref<1x2xi32, #tpu.memory_space<vmem>>, %arg5: memref<32x16xf32, #tpu.memory_space<vmem>>, %arg6: memref<32x16xf32, #tpu.memory_space<vmem>>, %arg7: memref<16x16xf32, #tpu.memory_space<vmem>>, %arg8: memref<16x8xf32, #tpu.memory_space<vmem>>, %arg9: memref<1x16xf32, #tpu.memory_space<vmem>>, %arg10: memref<1x16xf32, #tpu.memory_space<vmem>>, %arg11: memref<1x8xf32, #tpu.memory_space<vmem>>, %arg12: memref<2x128xf32, #tpu.memory_space<vmem>>) attributes {dimension_semantics = [#tpu.dimension_semantics<parallel>], iteration_bounds = array<i64: 1>, scalar_prefetch = 0 : i64, scratch_operands = 0 : i64, tpu.core_type = #tpu.core_type<tc>, window_params = [{transform_indices = @transform_0, window_bounds = array<i64: 2, 32>}, {transform_indices = @transform_1, window_bounds = array<i64: 8, 2, 16>}, {transform_indices = @transform_2, window_bounds = array<i64: 8, 2, 16>}, {transform_indices = @transform_3, window_bounds = array<i64: 1, 2>}, {pipeline_mode = #tpu.pipeline_mode<synchronous>, transform_indices = @transform_4, window_bounds = array<i64: 32, 16>}, {pipeline_mode = #tpu.pipeline_mode<synchronous>, transform_indices = @transform_5, window_bounds = array<i64: 32, 16>}, {pipeline_mode = #tpu.pipeline_mode<synchronous>, transform_indices = @transform_6, window_bounds = array<i64: 16, 16>}, {pipeline_mode = #tpu.pipeline_mode<synchronous>, transform_indices = @transform_7, window_bounds = array<i64: 16, 8>}, {pipeline_mode = #tpu.pipeline_mode<synchronous>, transform_indices = @transform_8, window_bounds = array<i64: 1, 16>}, {pipeline_mode = #tpu.pipeline_mode<synchronous>, transform_indices = @transform_9, window_bounds = array<i64: 1, 16>}, {pipeline_mode = #tpu.pipeline_mode<synchronous>, transform_indices = @transform_10, window_bounds = array<i64: 1, 8>}, {transform_indices = @transform_11, window_bounds = array<i64: 2, 128>}]} {
    %c0 = arith.constant 0 : index
    %c0_0 = arith.constant 0 : index
    %0 = vector.load %arg1[%c0, %c0_0] : memref<2x32xf32, #tpu.memory_space<vmem>>, vector<2x32xf32>
    %c0_1 = arith.constant 0 : index
    %c0_2 = arith.constant 0 : index
    %c0_3 = arith.constant 0 : index
    %1 = vector.load %arg2[%c0_1, %c0_2, %c0_3] : memref<8x2x16xf32, #tpu.memory_space<vmem>>, vector<8x2x16xf32>
    %c0_4 = arith.constant 0 : index
    %c0_5 = arith.constant 0 : index
    %c0_6 = arith.constant 0 : index
    %2 = vector.load %arg3[%c0_4, %c0_5, %c0_6] : memref<8x2x16xf32, #tpu.memory_space<vmem>>, vector<8x2x16xf32>
    %c0_7 = arith.constant 0 : index
    %c0_8 = arith.constant 0 : index
    %3 = vector.load %arg5[%c0_7, %c0_8] : memref<32x16xf32, #tpu.memory_space<vmem>>, vector<32x16xf32>
    %cst = arith.constant dense<0.000000e+00> : vector<2x16xf32>
    %4 = tpu.matmul %0, %3, %cst {dimension_numbers = #tpu.dot_dimension_numbers<[1], [0], [0], [1], [0, 0, 1, 1], [], []>} : vector<2x32xf32>, vector<32x16xf32>, vector<2x16xf32> -> vector<2x16xf32>
    %c0_9 = arith.constant 0 : index
    %c0_10 = arith.constant 0 : index
    %5 = vector.load %arg9[%c0_9, %c0_10] : memref<1x16xf32, #tpu.memory_space<vmem>>, vector<1x16xf32>
    %6 = vector.broadcast %5 : vector<1x16xf32> to vector<2x16xf32>
    %7 = arith.addf %4, %6 : vector<2x16xf32>
    %c0_11 = arith.constant 0 : index
    %c0_12 = arith.constant 0 : index
    %8 = vector.load %arg6[%c0_11, %c0_12] : memref<32x16xf32, #tpu.memory_space<vmem>>, vector<32x16xf32>
    %cst_13 = arith.constant dense<0.000000e+00> : vector<2x16xf32>
    %9 = tpu.matmul %0, %8, %cst_13 {dimension_numbers = #tpu.dot_dimension_numbers<[1], [0], [0], [1], [0, 0, 1, 1], [], []>} : vector<2x32xf32>, vector<32x16xf32>, vector<2x16xf32> -> vector<2x16xf32>
    %c0_14 = arith.constant 0 : index
    %c0_15 = arith.constant 0 : index
    %10 = vector.load %arg10[%c0_14, %c0_15] : memref<1x16xf32, #tpu.memory_space<vmem>>, vector<1x16xf32>
    %11 = vector.broadcast %10 : vector<1x16xf32> to vector<2x16xf32>
    %12 = arith.addf %9, %11 : vector<2x16xf32>
    %13 = vector.shape_cast %7 : vector<2x16xf32> to vector<1x2x16xf32>
    %14 = vector.broadcast %13 : vector<1x2x16xf32> to vector<8x2x16xf32>
    %15 = arith.mulf %14, %1 : vector<8x2x16xf32>
    %cst_16 = arith.constant dense<0.000000e+00> : vector<8x2xf32>
    %16 = vector.multi_reduction <add>, %15, %cst_16 [2] : vector<8x2x16xf32> to vector<8x2xf32>
    %17 = tpu.iota {dimensions = array<i32: 0>} : vector<8x2xi32>
    %c0_17 = arith.constant 0 : index
    %c0_18 = arith.constant 0 : index
    %18 = vector.load %arg4[%c0_17, %c0_18] : memref<1x2xi32, #tpu.memory_space<vmem>>, vector<1x2xi32>
    %19 = vector.broadcast %18 : vector<1x2xi32> to vector<8x2xi32>
    %20 = arith.cmpi sge, %17, %19 : vector<8x2xi32>
    %cst_19 = arith.constant 0xFF800000 : f32
    %21 = vector.broadcast %cst_19 : f32 to vector<8x2xf32>
    %22 = arith.select %20, %21, %16 : vector<8x2xi1>, vector<8x2xf32>
    %cst_20 = arith.constant dense<0xFF800000> : vector<2xf32>
    %23 = vector.multi_reduction <maximumf>, %22, %cst_20 [0] : vector<8x2xf32> to vector<2xf32>
    %24 = vector.shape_cast %23 : vector<2xf32> to vector<1x2xf32>
    %25 = vector.broadcast %24 : vector<1x2xf32> to vector<8x2xf32>
    %26 = arith.subf %22, %25 : vector<8x2xf32>
    %27 = math.exp %26 : vector<8x2xf32>
    %cst_21 = arith.constant dense<0.000000e+00> : vector<2xf32>
    %28 = vector.multi_reduction <add>, %27, %cst_21 [0] : vector<8x2xf32> to vector<2xf32>
    %29 = vector.shape_cast %28 : vector<2xf32> to vector<1x2xf32>
    %30 = tpu.reciprocal %29 : vector<1x2xf32> -> vector<1x2xf32>
    %31 = vector.broadcast %30 : vector<1x2xf32> to vector<8x2xf32>
    %32 = arith.mulf %27, %31 : vector<8x2xf32>
    %33 = vector.shape_cast %32 : vector<8x2xf32> to vector<8x2x1xf32>
    %34 = vector.broadcast %33 : vector<8x2x1xf32> to vector<8x2x16xf32>
    %35 = arith.mulf %34, %2 : vector<8x2x16xf32>
    %cst_22 = arith.constant dense<0.000000e+00> : vector<2x16xf32>
    %36 = vector.multi_reduction <add>, %35, %cst_22 [0] : vector<8x2x16xf32> to vector<2x16xf32>
    %c0_23 = arith.constant 0 : index
    %c0_24 = arith.constant 0 : index
    %37 = vector.load %arg7[%c0_23, %c0_24] : memref<16x16xf32, #tpu.memory_space<vmem>>, vector<16x16xf32>
    %cst_25 = arith.constant dense<0.000000e+00> : vector<2x16xf32>
    %38 = tpu.matmul %36, %37, %cst_25 {dimension_numbers = #tpu.dot_dimension_numbers<[1], [0], [0], [1], [0, 0, 1, 1], [], []>} : vector<2x16xf32>, vector<16x16xf32>, vector<2x16xf32> -> vector<2x16xf32>
    %39 = arith.addf %12, %38 : vector<2x16xf32>
    %cst_26 = arith.constant 0.000000e+00 : f32
    %40 = vector.broadcast %cst_26 : f32 to vector<2x16xf32>
    %41 = arith.cmpf oge, %39, %40 : vector<2x16xf32>
    %cst_27 = arith.constant 0.00999999977 : f32
    %42 = vector.broadcast %cst_27 : f32 to vector<2x16xf32>
    %43 = arith.mulf %42, %39 : vector<2x16xf32>
    %44 = arith.select %41, %39, %43 : vector<2x16xi1>, vector<2x16xf32>
    %c0_28 = arith.constant 0 : index
    %c0_29 = arith.constant 0 : index
    %45 = vector.load %arg8[%c0_28, %c0_29] : memref<16x8xf32, #tpu.memory_space<vmem>>, vector<16x8xf32>
    %cst_30 = arith.constant dense<0.000000e+00> : vector<2x8xf32>
    %46 = tpu.matmul %44, %45, %cst_30 {dimension_numbers = #tpu.dot_dimension_numbers<[1], [0], [0], [1], [0, 0, 1, 1], [], []>} : vector<2x16xf32>, vector<16x8xf32>, vector<2x8xf32> -> vector<2x8xf32>
    %c0_31 = arith.constant 0 : index
    %c0_32 = arith.constant 0 : index
    %47 = vector.load %arg11[%c0_31, %c0_32] : memref<1x8xf32, #tpu.memory_space<vmem>>, vector<1x8xf32>
    %48 = vector.broadcast %47 : vector<1x8xf32> to vector<2x8xf32>
    %49 = arith.addf %46, %48 : vector<2x8xf32>
    %cst_33 = arith.constant 0.000000e+00 : f32
    %50 = vector.broadcast %cst_33 : f32 to vector<2x104xf32>
    %51 = tpu.concatenate %36, %49, %50 in 1 : vector<2x16xf32>, vector<2x8xf32>, vector<2x104xf32> -> vector<2x128xf32>
    %c0_34 = arith.constant 0 : index
    %c0_35 = arith.constant 0 : index
    %52 = vector.load %arg12[%c0_34, %c0_35] : memref<2x128xf32, #tpu.memory_space<vmem>>, vector<2x128xf32>
    tpu.vector_store %arg12[%c0_34, %c0_35], %51 {strides = array<i32>} : memref<2x128xf32, #tpu.memory_space<vmem>>, vector<2x128xf32>,
    return
  }
  func.func @transform_0(%arg0: i32) -> (i32, i32) {
    %c0_i32 = arith.constant 0 : i32
    %c0_i32_0 = arith.constant 0 : i32
    return %arg0, %c0_i32 : i32, i32
  }
  func.func @transform_1(%arg0: i32) -> (i32, i32, i32) {
    %c0_i32 = arith.constant 0 : i32
    %c0_i32_0 = arith.constant 0 : i32
    %c0_i32_1 = arith.constant 0 : i32
    return %c0_i32, %arg0, %c0_i32_0 : i32, i32, i32
  }
  func.func @transform_2(%arg0: i32) -> (i32, i32, i32) {
    %c0_i32 = arith.constant 0 : i32
    %c0_i32_0 = arith.constant 0 : i32
    %c0_i32_1 = arith.constant 0 : i32
    return %c0_i32, %arg0, %c0_i32_0 : i32, i32, i32
  }
  func.func @transform_3(%arg0: i32) -> (i32, i32) {
    %c0_i32 = arith.constant 0 : i32
    %c0_i32_0 = arith.constant 0 : i32
    return %c0_i32, %arg0 : i32, i32
  }
  func.func @transform_4(%arg0: i32) -> (i32, i32) {
    %c0_i32 = arith.constant 0 : i32
    %c0_i32_0 = arith.constant 0 : i32
    %c0_i32_1 = arith.constant 0 : i32
    return %c0_i32, %c0_i32_0 : i32, i32
  }
  func.func @transform_5(%arg0: i32) -> (i32, i32) {
    %c0_i32 = arith.constant 0 : i32
    %c0_i32_0 = arith.constant 0 : i32
    %c0_i32_1 = arith.constant 0 : i32
    return %c0_i32, %c0_i32_0 : i32, i32
  }
  func.func @transform_6(%arg0: i32) -> (i32, i32) {
    %c0_i32 = arith.constant 0 : i32
    %c0_i32_0 = arith.constant 0 : i32
    %c0_i32_1 = arith.constant 0 : i32
    return %c0_i32, %c0_i32_0 : i32, i32
  }
  func.func @transform_7(%arg0: i32) -> (i32, i32) {
    %c0_i32 = arith.constant 0 : i32
    %c0_i32_0 = arith.constant 0 : i32
    %c0_i32_1 = arith.constant 0 : i32
    return %c0_i32, %c0_i32_0 : i32, i32
  }
  func.func @transform_8(%arg0: i32) -> (i32, i32) {
    %c0_i32 = arith.constant 0 : i32
    %c0_i32_0 = arith.constant 0 : i32
    %c0_i32_1 = arith.constant 0 : i32
    return %c0_i32, %c0_i32_0 : i32, i32
  }
  func.func @transform_9(%arg0: i32) -> (i32, i32) {
    %c0_i32 = arith.constant 0 : i32
    %c0_i32_0 = arith.constant 0 : i32
    %c0_i32_1 = arith.constant 0 : i32
    return %c0_i32, %c0_i32_0 : i32, i32
  }
  func.func @transform_10(%arg0: i32) -> (i32, i32) {
    %c0_i32 = arith.constant 0 : i32
    %c0_i32_0 = arith.constant 0 : i32
    %c0_i32_1 = arith.constant 0 : i32
    return %c0_i32, %c0_i32_0 : i32, i32
  }
  func.func @transform_11(%arg0: i32) -> (i32, i32) {
    %c0_i32 = arith.constant 0 : i32
    %c0_i32_0 = arith.constant 0 : i32
    return %arg0, %c0_i32 : i32, i32
  }
}

</mosaic_0001>

<llo_original>
// kernel: tpu_custom_call.1
$region0: #{tpu_custom_call.1}
  #allocation0 [shape = 'u32[]', space=smem, size = 0x4, offset = 0x4, fixed_abs, tag = 'smem constant byte address 0x4 - core index']
  #allocation1 [shape = 'u32[144,128]{1,0:T(1,128)}', space=vmem, size = 0x12000, scoped, tag = 'internal scratch']
  %s0 = inlined_call_operand.vmem [shape: f32[2,32], index: 0, kind: input, shape index: {}]
  %s1 = inlined_call_operand.vmem [shape: f32[8,2,16], index: 1, kind: input, shape index: {}]
  %s2 = inlined_call_operand.vmem [shape: f32[8,2,16], index: 2, kind: input, shape index: {}]
  %s3 = inlined_call_operand.vmem [shape: s32[1,2], index: 3, kind: input, shape index: {}]
  %s4 = inlined_call_operand.vmem [shape: f32[32,16], index: 4, kind: input, shape index: {}]
  %s5 = inlined_call_operand.vmem [shape: f32[32,16], index: 5, kind: input, shape index: {}]
  %s6 = inlined_call_operand.vmem [shape: f32[16,16], index: 6, kind: input, shape index: {}]
  %s7 = inlined_call_operand.vmem [shape: f32[16,8], index: 7, kind: input, shape index: {}]
  %s8 = inlined_call_operand.vmem [shape: f32[1,16], index: 8, kind: input, shape index: {}]
  %s9 = inlined_call_operand.vmem [shape: f32[1,16], index: 9, kind: input, shape index: {}]
  %s10 = inlined_call_operand.vmem [shape: f32[1,8], index: 10, kind: input, shape index: {}]
  %s11 = inlined_call_operand.hbm [shape: f32[2,128], index: 11, kind: output, shape index: {}]
  %s12 = sld [smem:[#allocation0]]
  $region54: #{tpu_custom_call.1} parent=0
    _
  %s14 = ssub.s32 1, %s12
  %s15 = scalar_select 0, %s14, %s12
  $region1: #{tpu_custom_call.1} parent=0
    #allocation2 [shape = 'u8[1024]{0}', space=vmem, size = 0x400, scoped, tag = 'output window, operand 0, single buffered']
    #allocation3 [shape = 's32[1]{0}', space=sflag, size = 0x4, scoped, tag = 'scoped memory for tpu_custom_call.1']
    %16 = vsyncpa [#allocation3], 0
    // Predicated region
    $region2: #{tpu_custom_call.1} parent=1 // pred_check
      _
    $region3: #{tpu_custom_call.1} parent=1 // pred_check_branch
      %18 = sbr.rel (0) target = $region5
    $region4: #{tpu_custom_call.1} parent=1 // pred_region
      _
    $region5: #{tpu_custom_call.1} parent=1 // pred_fallthru
      _
    // Predicated region
    $region6: #{tpu_custom_call.1} parent=1 // pred_check
      _
    $region7: #{tpu_custom_call.1} parent=1 // pred_check_branch
      %20 = sbr.rel (0) target = $region9
    $region8: #{tpu_custom_call.1} parent=1 // pred_region
      _
    $region9: #{tpu_custom_call.1} parent=1 // pred_fallthru
      _
    // Predicated region
    $region10: #{tpu_custom_call.1} parent=1 // pred_check
      _
    $region11: #{tpu_custom_call.1} parent=1 // pred_check_branch
      %22 = sbr.rel (0) target = $region13
    $region12: #{tpu_custom_call.1} parent=1 // pred_region
      _
    $region13: #{tpu_custom_call.1} parent=1 // pred_fallthru
      _
    // Predicated region
    $region14: #{tpu_custom_call.1} parent=1 // pred_check
      _
    $region15: #{tpu_custom_call.1} parent=1 // pred_check_branch
      %24 = sbr.rel (0) target = $region17
    $region16: #{tpu_custom_call.1} parent=1 // pred_region
      _
    $region17: #{tpu_custom_call.1} parent=1 // pred_fallthru
      _
    // Predicated region
    $region18: #{tpu_custom_call.1} parent=1 // pred_check
      _
    $region19: #{tpu_custom_call.1} parent=1 // pred_check_branch
      %26 = sbr.rel (0) target = $region21
    $region20: #{tpu_custom_call.1} parent=1 // pred_region
      _
    $region21: #{tpu_custom_call.1} parent=1 // pred_fallthru
      _
    // Predicated region
    $region22: #{tpu_custom_call.1} parent=1 // pred_check
      _
    $region23: #{tpu_custom_call.1} parent=1 // pred_check_branch
      %28 = sbr.rel (0) target = $region25
    $region24: #{tpu_custom_call.1} parent=1 // pred_region
      _
    $region25: #{tpu_custom_call.1} parent=1 // pred_fallthru
      _
    // Predicated region
    $region26: #{tpu_custom_call.1} parent=1 // pred_check
      _
    $region27: #{tpu_custom_call.1} parent=1 // pred_check_branch
      %30 = sbr.rel (0) target = $region29
    $region28: #{tpu_custom_call.1} parent=1 // pred_region
      _
    $region29: #{tpu_custom_call.1} parent=1 // pred_fallthru
      _
    // Predicated region
    $region30: #{tpu_custom_call.1} parent=1 // pred_check
      _
    $region31: #{tpu_custom_call.1} parent=1 // pred_check_branch
      %32 = sbr.rel (0) target = $region33
    $region32: #{tpu_custom_call.1} parent=1 // pred_region
      _
    $region33: #{tpu_custom_call.1} parent=1 // pred_fallthru
      _
    // Predicated region
    $region34: #{tpu_custom_call.1} parent=1 // pred_check
      _
    $region35: #{tpu_custom_call.1} parent=1 // pred_check_branch
      %34 = sbr.rel (0) target = $region37
    $region36: #{tpu_custom_call.1} parent=1 // pred_region
      _
    $region37: #{tpu_custom_call.1} parent=1 // pred_fallthru
      _
    // Predicated region
    $region38: #{tpu_custom_call.1} parent=1 // pred_check
      _
    $region39: #{tpu_custom_call.1} parent=1 // pred_check_branch
      %36 = sbr.rel (0) target = $region41
    $region40: #{tpu_custom_call.1} parent=1 // pred_region
      _
    $region41: #{tpu_custom_call.1} parent=1 // pred_fallthru
      _
    // Predicated region
    $region42: #{tpu_custom_call.1} parent=1 // pred_check
      _
    $region43: #{tpu_custom_call.1} parent=1 // pred_check_branch
      %38 = sbr.rel (0) target = $region45
    $region44: #{tpu_custom_call.1} parent=1 // pred_region
      _
    $region45: #{tpu_custom_call.1} parent=1 // pred_fallthru
      _
    %v39 = vld [vmem:[%s0] sm:$0x3]
    %v40 = vld [vmem:[%s1] sm:$0x3]
    %v41 = vld [vmem:[%s1 + $0x2] sm:$0x3]
    %v42 = vld [vmem:[%s1 + $0x4] sm:$0x3]
    %v43 = vld [vmem:[%s1 + $0x6] sm:$0x3]
    %v44 = vld [vmem:[%s1 + $0x8] sm:$0x3]
    %v45 = vld [vmem:[%s1 + $0xa] sm:$0x3]
    %v46 = vld [vmem:[%s1 + $0xc] sm:$0x3]
    %v47 = vld [vmem:[%s1 + $0xe] sm:$0x3]
    %v48 = vld [vmem:[%s2] sm:$0x3]
    %v49 = vld [vmem:[%s2 + $0x2] sm:$0x3]
    %v50 = vld [vmem:[%s2 + $0x4] sm:$0x3]
    %v51 = vld [vmem:[%s2 + $0x6] sm:$0x3]
    %v52 = vld [vmem:[%s2 + $0x8] sm:$0x3]
    %v53 = vld [vmem:[%s2 + $0xa] sm:$0x3]
    %v54 = vld [vmem:[%s2 + $0xc] sm:$0x3]
    %v55 = vld [vmem:[%s2 + $0xe] sm:$0x3]
    %v56 = vld [vmem:[%s4] sm:$0xff]
    %v57 = vld [vmem:[%s4 + $0x8] sm:$0xff]
    %v58 = vld [vmem:[%s4 + $0x10] sm:$0xff]
    %v59 = vld [vmem:[%s4 + $0x18] sm:$0xff]
    %v60 = vld [vmem:[%s8] sm:$0x1]
    %v62 = vlaneseq
    %v63 = vshrl.u32 %v62, 7
    %v64 = vsub.s32 0, %v63
    %v65 = vrot.slane %v60, %v64
    %vm67 = vcmask 261120
    %v69 = vsel %vm67, %v39, 0
    %71 = vmatprep.subr.mxu0 0.0
    %72 = vmatpush1.msra.mxu0 %v56
    %73 = vmatprep.subr.mxu0 0.0
    %74 = vmatpush1.msra.mxu0 %v57
    %75 = vmatprep.subr.mxu0 0.0
    %76 = vmatpush1.msra.mxu0 %v58
    %77 = vmatprep.subr.mxu0 0.0
    %78 = vmatpush1.msra.mxu0 %v59
    %79 = vmatprep.subr.mxu0 0.0
    %80 = vmatpush1.msra.mxu0 0.0
    %81 = vmatprep.subr.mxu0 0.0
    %82 = vmatpush1.msra.mxu0 0.0
    %83 = vmatprep.subr.mxu0 0.0
    %84 = vmatpush1.msra.mxu0 0.0
    %85 = vmatprep.subr.mxu0 0.0
    %86 = vmatpush1.msra.mxu0 0.0
    %87 = vmatprep.subr.mxu0 0.0
    %88 = vmatpush1.msra.mxu0 0.0
    %89 = vmatprep.subr.mxu0 0.0
    %90 = vmatpush1.msra.mxu0 0.0
    %91 = vmatprep.subr.mxu0 0.0
    %92 = vmatpush1.msra.mxu0 0.0
    %93 = vmatprep.subr.mxu0 0.0
    %94 = vmatpush1.msra.mxu0 0.0
    %95 = vmatprep.subr.mxu0 0.0
    %96 = vmatpush1.msra.mxu0 0.0
    %97 = vmatprep.subr.mxu0 0.0
    %98 = vmatpush1.msra.mxu0 0.0
    %99 = vmatprep.subr.mxu0 0.0
    %100 = vmatpush1.msra.mxu0 0.0
    %101 = vmatprep.subr.mxu0 0.0
    %102 = vmatpush1.msra.mxu0 0.0
    %103 = vmatprep.subr.mxu0 0.0
    %104 = vmatpush1.msra.mxu0 0.0
    %105 = vmatprep.subr.mxu0 0.0
    %106 = vmatpush1.msra.mxu0 0.0
    %107 = vmatprep.subr.mxu0 0.0
    %108 = vmatpush1.msra.mxu0 0.0
    %109 = vmatprep.subr.mxu0 0.0
    %110 = vmatpush1.msra.mxu0 0.0
    %111 = vmatprep.subr.mxu0 0.0
    %112 = vmatpush1.msra.mxu0 0.0
    %113 = vmatprep.subr.mxu0 0.0
    %114 = vmatpush1.msra.mxu0 0.0
    %115 = vmatprep.subr.mxu0 0.0
    %116 = vmatpush1.msra.mxu0 0.0
    %117 = vmatprep.subr.mxu0 0.0
    %118 = vmatpush1.msra.mxu0 0.0
    %119 = vmatprep.subr.mxu0 0.0
    %120 = vmatpush1.msra.mxu0 0.0
    %121 = vmatprep.subr.mxu0 0.0
    %122 = vmatpush1.msra.mxu0 0.0
    %123 = vmatprep.subr.mxu0 0.0
    %124 = vmatpush1.msra.mxu0 0.0
    %125 = vmatprep.subr.mxu0 0.0
    %126 = vmatpush1.msra.mxu0 0.0
    %127 = vmatprep.subr.mxu0 0.0
    %128 = vmatpush1.msra.mxu0 0.0
    %129 = vmatprep.subr.mxu0 0.0
    %130 = vmatpush1.msra.mxu0 0.0
    %131 = vmatprep.subr.mxu0 0.0
    %132 = vmatpush1.msra.mxu0 0.0
    %133 = vmatprep.subr.mxu0 0.0
    %134 = vmatpush1.msra.mxu0 0.0
    %135 = vmatprep.mubr.f32.mxu0 0.0
    %136 = vmatmul.mubr.f32.gmra.mrb[0].mxu0 %v69
    %v137 = vpop.f32.mrb[0].mxu0
    %v138 = vadd.f32 %v65, %v137
    %v139 = vpop.f32.mrb[0].mxu0
    %140 = vdwg.mxu0
    %v141 = vld [vmem:[%s5] sm:$0xff]
    %v142 = vld [vmem:[%s5 + $0x8] sm:$0xff]
    %v143 = vld [vmem:[%s5 + $0x10] sm:$0xff]
    %v144 = vld [vmem:[%s5 + $0x18] sm:$0xff]
    %v145 = vld [vmem:[%s9] sm:$0x1]
    %v147 = vlaneseq
    %v148 = vshrl.u32 %v147, 7
    %v149 = vsub.s32 0, %v148
    %v150 = vrot.slane %v145, %v149
    %152 = vmatprep.subr.mxu0 0.0
    %153 = vmatpush1.msra.mxu0 %v141
    %154 = vmatprep.subr.mxu0 0.0
    %155 = vmatpush1.msra.mxu0 %v142
    %156 = vmatprep.subr.mxu0 0.0
    %157 = vmatpush1.msra.mxu0 %v143
    %158 = vmatprep.subr.mxu0 0.0
    %159 = vmatpush1.msra.mxu0 %v144
    %160 = vmatprep.subr.mxu0 0.0
    %161 = vmatpush1.msra.mxu0 0.0
    %162 = vmatprep.subr.mxu0 0.0
    %163 = vmatpush1.msra.mxu0 0.0
    %164 = vmatprep.subr.mxu0 0.0
    %165 = vmatpush1.msra.mxu0 0.0
    %166 = vmatprep.subr.mxu0 0.0
    %167 = vmatpush1.msra.mxu0 0.0
    %168 = vmatprep.subr.mxu0 0.0
    %169 = vmatpush1.msra.mxu0 0.0
    %170 = vmatprep.subr.mxu0 0.0
    %171 = vmatpush1.msra.mxu0 0.0
    %172 = vmatprep.subr.mxu0 0.0
    %173 = vmatpush1.msra.mxu0 0.0
    %174 = vmatprep.subr.mxu0 0.0
    %175 = vmatpush1.msra.mxu0 0.0
    %176 = vmatprep.subr.mxu0 0.0
    %177 = vmatpush1.msra.mxu0 0.0
    %178 = vmatprep.subr.mxu0 0.0
    %179 = vmatpush1.msra.mxu0 0.0
    %180 = vmatprep.subr.mxu0 0.0
    %181 = vmatpush1.msra.mxu0 0.0
    %182 = vmatprep.subr.mxu0 0.0
    %183 = vmatpush1.msra.mxu0 0.0
    %184 = vmatprep.subr.mxu0 0.0
    %185 = vmatpush1.msra.mxu0 0.0
    %186 = vmatprep.subr.mxu0 0.0
    %187 = vmatpush1.msra.mxu0 0.0
    %188 = vmatprep.subr.mxu0 0.0
    %189 = vmatpush1.msra.mxu0 0.0
    %190 = vmatprep.subr.mxu0 0.0
    %191 = vmatpush1.msra.mxu0 0.0
    %192 = vmatprep.subr.mxu0 0.0
    %193 = vmatpush1.msra.mxu0 0.0
    %194 = vmatprep.subr.mxu0 0.0
    %195 = vmatpush1.msra.mxu0 0.0
    %196 = vmatprep.subr.mxu0 0.0
    %197 = vmatpush1.msra.mxu0 0.0
    %198 = vmatprep.subr.mxu0 0.0
    %199 = vmatpush1.msra.mxu0 0.0
    %200 = vmatprep.subr.mxu0 0.0
    %201 = vmatpush1.msra.mxu0 0.0
    %202 = vmatprep.subr.mxu0 0.0
    %203 = vmatpush1.msra.mxu0 0.0
    %204 = vmatprep.subr.mxu0 0.0
    %205 = vmatpush1.msra.mxu0 0.0
    %206 = vmatprep.subr.mxu0 0.0
    %207 = vmatpush1.msra.mxu0 0.0
    %208 = vmatprep.subr.mxu0 0.0
    %209 = vmatpush1.msra.mxu0 0.0
    %210 = vmatprep.subr.mxu0 0.0
    %211 = vmatpush1.msra.mxu0 0.0
    %212 = vmatprep.subr.mxu0 0.0
    %213 = vmatpush1.msra.mxu0 0.0
    %214 = vmatprep.subr.mxu0 0.0
    %215 = vmatpush1.msra.mxu0 0.0
    %216 = vmatprep.mubr.f32.mxu0 0.0
    %217 = vmatmul.mubr.f32.gmra.mrb[0].mxu0 %v69
    %v218 = vpop.f32.mrb[0].mxu0
    %v219 = vadd.f32 %v150, %v218
    %v220 = vpop.f32.mrb[0].mxu0
    %221 = vdwg.mxu0
    %v222 = vmul.f32 %v138, %v40
    %v223 = vmul.f32 %v138, %v41
    %v224 = vmul.f32 %v138, %v42
    %v225 = vmul.f32 %v138, %v43
    %v226 = vmul.f32 %v138, %v44
    %v227 = vmul.f32 %v138, %v45
    %v228 = vmul.f32 %v138, %v46
    %v229 = vmul.f32 %v138, %v47
    %vm230 = vcmask 123904
    %v231 = vsel %vm230, %v222, 0.0
    %232 = vadd.xlane.f32.xlu0 %v231
    %v233 = vpop.xlane.xlu0 %232
    %v234 = vsel %vm230, %v223, 0.0
    %235 = vadd.xlane.f32.xlu0 %v234
    %v236 = vpop.xlane.xlu0 %235
    %v237 = vsel %vm230, %v224, 0.0
    %238 = vadd.xlane.f32.xlu0 %v237
    %v239 = vpop.xlane.xlu0 %238
    %v240 = vsel %vm230, %v225, 0.0
    %241 = vadd.xlane.f32.xlu0 %v240
    %v242 = vpop.xlane.xlu0 %241
    %v243 = vsel %vm230, %v226, 0.0
    %244 = vadd.xlane.f32.xlu0 %v243
    %v245 = vpop.xlane.xlu0 %244
    %v246 = vsel %vm230, %v227, 0.0
    %247 = vadd.xlane.f32.xlu0 %v246
    %v248 = vpop.xlane.xlu0 %247
    %v249 = vsel %vm230, %v228, 0.0
    %250 = vadd.xlane.f32.xlu0 %v249
    %v251 = vpop.xlane.xlu0 %250
    %v252 = vsel %vm230, %v229, 0.0
    %253 = vadd.xlane.f32.xlu0 %v252
    %v254 = vpop.xlane.xlu0 %253
    %v255 = vlaneseq
    %v256 = vshrl.u32 %v255, 7
    %v257 = vld [vmem:[%s3] sm:$0x1]
    %v258 = vlaneseq
    %v259 = vshrl.u32 %v258, 7
    %v260 = vsub.s32 0, %v259
    %v261 = vrot.slane %v257, %v260
    %vm262 = vcmp.ge.s32.totalorder %v256, %v261
    %v271 = vlaneseq
    %v272 = vand.u32 %v271, 127
    %v273 = vlaneseq
    %v274 = vshrl.u32 %v273, 7
    %v275 = vsub.s32 %v272, %v274
    %v276 = vrot.slane %v233, %v275
    %v277 = vlaneseq
    %v278 = vshrl.u32 %v277, 7
    %v279 = vsub.s32 %v272, %v278
    %v280 = vrot.slane %v236, %v279
    %v281 = vlaneseq
    %v282 = vshrl.u32 %v281, 7
    %v283 = vsub.s32 %v272, %v282
    %v284 = vrot.slane %v239, %v283
    %v285 = vlaneseq
    %v286 = vshrl.u32 %v285, 7
    %v287 = vsub.s32 %v272, %v286
    %v288 = vrot.slane %v242, %v287
    %v289 = vlaneseq
    %v290 = vshrl.u32 %v289, 7
    %v291 = vsub.s32 %v272, %v290
    %v292 = vrot.slane %v245, %v291
    %v293 = vlaneseq
    %v294 = vshrl.u32 %v293, 7
    %v295 = vsub.s32 %v272, %v294
    %v296 = vrot.slane %v248, %v295
    %v297 = vlaneseq
    %v298 = vshrl.u32 %v297, 7
    %v299 = vsub.s32 %v272, %v298
    %v300 = vrot.slane %v251, %v299
    %v301 = vlaneseq
    %v302 = vshrl.u32 %v301, 7
    %v303 = vsub.s32 %v272, %v302
    %v304 = vrot.slane %v254, %v303
    %vm305 = vcmask 1041409
    %v306 = vsel %vm305, %v280, %v276
    %vm307 = vcmask 1042434
    %v308 = vsel %vm307, %v284, %v306
    %vm309 = vcmask 1043459
    %v310 = vsel %vm309, %v288, %v308
    %vm311 = vcmask 1044484
    %v312 = vsel %vm311, %v292, %v310
    %vm313 = vcmask 1045509
    %v314 = vsel %vm313, %v296, %v312
    %vm315 = vcmask 1046534
    %v316 = vsel %vm315, %v300, %v314
    %vm317 = vcmask 1047559
    %v318 = vsel %vm317, %v304, %v316
    %v320 = vsel %vm262, -inf, %v318
    %vm321 = vcmask 15360
    %v322 = vsel %vm321, %v320, -inf
    %v323 = vrot.slane %v322, 4
    %v324 = vmax.f32 %v322, %v323
    %v325 = vrot.slane %v324, 2
    %v326 = vmax.f32 %v324, %v325
    %v327 = vrot.slane %v326, 1
    %v328 = vmax.f32 %v326, %v327
    %v329 = vsub.f32 %v320, %v328
    %v330 = vmul.f32 %v329, 1.442695
    %v331 = vpow.pop %v330
    %v332 = vsel %vm321, %v331, 0.0
    %v333 = vrot.slane %v332, 4
    %v334 = vadd.f32 %v332, %v333
    %v335 = vrot.slane %v334, 2
    %v336 = vadd.f32 %v334, %v335
    %v337 = vrot.slane %v336, 1
    %v338 = vadd.f32 %v336, %v337
    %v339 = vrcp.pop %v338
    %v340 = vmul.f32 %v331, %v339
    %v341 = vlaneseq
    %v342 = vshrl.u32 %v341, 7
    %v343 = vsub.s32 0, %v342
    %v344 = vrot.slane %v340, %v343
    %346 = vbcast.lane.b32.xlu0 %v344, 256
    %v347 = vpop.permute.xlu0 %346
    %v348 = vlaneseq
    %v349 = vshrl.u32 %v348, 7
    %v350 = vsub.s32 1, %v349
    %v351 = vrot.slane %v340, %v350
    %353 = vbcast.lane.b32.xlu0 %v351, 256
    %v354 = vpop.permute.xlu0 %353
    %v355 = vlaneseq
    %v356 = vshrl.u32 %v355, 7
    %v357 = vsub.s32 2, %v356
    %v358 = vrot.slane %v340, %v357
    %360 = vbcast.lane.b32.xlu0 %v358, 256
    %v361 = vpop.permute.xlu0 %360
    %v362 = vlaneseq
    %v363 = vshrl.u32 %v362, 7
    %v364 = vsub.s32 3, %v363
    %v365 = vrot.slane %v340, %v364
    %367 = vbcast.lane.b32.xlu0 %v365, 256
    %v368 = vpop.permute.xlu0 %367
    %v369 = vlaneseq
    %v370 = vshrl.u32 %v369, 7
    %v371 = vsub.s32 4, %v370
    %v372 = vrot.slane %v340, %v371
    %374 = vbcast.lane.b32.xlu0 %v372, 256
    %v375 = vpop.permute.xlu0 %374
    %v376 = vlaneseq
    %v377 = vshrl.u32 %v376, 7
    %v378 = vsub.s32 5, %v377
    %v379 = vrot.slane %v340, %v378
    %381 = vbcast.lane.b32.xlu0 %v379, 256
    %v382 = vpop.permute.xlu0 %381
    %v383 = vlaneseq
    %v384 = vshrl.u32 %v383, 7
    %v385 = vsub.s32 6, %v384
    %v386 = vrot.slane %v340, %v385
    %388 = vbcast.lane.b32.xlu0 %v386, 256
    %v389 = vpop.permute.xlu0 %388
    %v390 = vlaneseq
    %v391 = vshrl.u32 %v390, 7
    %v392 = vsub.s32 7, %v391
    %v393 = vrot.slane %v340, %v392
    %395 = vbcast.lane.b32.xlu0 %v393, 256
    %v396 = vpop.permute.xlu0 %395
    %v397 = vmul.f32 %v347, %v48
    %v398 = vmul.f32 %v354, %v49
    %v399 = vmul.f32 %v361, %v50
    %v400 = vmul.f32 %v368, %v51
    %v401 = vmul.f32 %v375, %v52
    %v402 = vmul.f32 %v382, %v53
    %v403 = vmul.f32 %v389, %v54
    %v404 = vmul.f32 %v396, %v55
    %v405 = vsel %vm230, %v397, 0.0
    %v406 = vsel %vm230, %v398, 0.0
    %v407 = vadd.f32 %v405, %v406
    %v408 = vsel %vm230, %v399, 0.0
    %v409 = vadd.f32 %v407, %v408
    %v410 = vsel %vm230, %v400, 0.0
    %v411 = vadd.f32 %v409, %v410
    %v412 = vsel %vm230, %v401, 0.0
    %v413 = vadd.f32 %v411, %v412
    %v414 = vsel %vm230, %v402, 0.0
    %v415 = vadd.f32 %v413, %v414
    %v416 = vsel %vm230, %v403, 0.0
    %v417 = vadd.f32 %v415, %v416
    %v418 = vsel %vm230, %v404, 0.0
    %v419 = vadd.f32 %v417, %v418
    %v420 = vld [vmem:[%s6] sm:$0xff]
    %v421 = vld [vmem:[%s6 + $0x8] sm:$0xff]
    %vm422 = vcmask 130048
    %v424 = vsel %vm422, %v419, 0
    %426 = vmatprep.subr.mxu0 0.0
    %427 = vmatpush1.msra.mxu0 %v420
    %428 = vmatprep.subr.mxu0 0.0
    %429 = vmatpush1.msra.mxu0 %v421
    %430 = vmatprep.subr.mxu0 0.0
    %431 = vmatpush1.msra.mxu0 0.0
    %432 = vmatprep.subr.mxu0 0.0
    %433 = vmatpush1.msra.mxu0 0.0
    %434 = vmatprep.subr.mxu0 0.0
    %435 = vmatpush1.msra.mxu0 0.0
    %436 = vmatprep.subr.mxu0 0.0
    %437 = vmatpush1.msra.mxu0 0.0
    %438 = vmatprep.subr.mxu0 0.0
    %439 = vmatpush1.msra.mxu0 0.0
    %440 = vmatprep.subr.mxu0 0.0
    %441 = vmatpush1.msra.mxu0 0.0
    %442 = vmatprep.subr.mxu0 0.0
    %443 = vmatpush1.msra.mxu0 0.0
    %444 = vmatprep.subr.mxu0 0.0
    %445 = vmatpush1.msra.mxu0 0.0
    %446 = vmatprep.subr.mxu0 0.0
    %447 = vmatpush1.msra.mxu0 0.0
    %448 = vmatprep.subr.mxu0 0.0
    %449 = vmatpush1.msra.mxu0 0.0
    %450 = vmatprep.subr.mxu0 0.0
    %451 = vmatpush1.msra.mxu0 0.0
    %452 = vmatprep.subr.mxu0 0.0
    %453 = vmatpush1.msra.mxu0 0.0
    %454 = vmatprep.subr.mxu0 0.0
    %455 = vmatpush1.msra.mxu0 0.0
    %456 = vmatprep.subr.mxu0 0.0
    %457 = vmatpush1.msra.mxu0 0.0
    %458 = vmatprep.subr.mxu0 0.0
    %459 = vmatpush1.msra.mxu0 0.0
    %460 = vmatprep.subr.mxu0 0.0
    %461 = vmatpush1.msra.mxu0 0.0
    %462 = vmatprep.subr.mxu0 0.0
    %463 = vmatpush1.msra.mxu0 0.0
    %464 = vmatprep.subr.mxu0 0.0
    %465 = vmatpush1.msra.mxu0 0.0
    %466 = vmatprep.subr.mxu0 0.0
    %467 = vmatpush1.msra.mxu0 0.0
    %468 = vmatprep.subr.mxu0 0.0
    %469 = vmatpush1.msra.mxu0 0.0
    %470 = vmatprep.subr.mxu0 0.0
    %471 = vmatpush1.msra.mxu0 0.0
    %472 = vmatprep.subr.mxu0 0.0
    %473 = vmatpush1.msra.mxu0 0.0
    %474 = vmatprep.subr.mxu0 0.0
    %475 = vmatpush1.msra.mxu0 0.0
    %476 = vmatprep.subr.mxu0 0.0
    %477 = vmatpush1.msra.mxu0 0.0
    %478 = vmatprep.subr.mxu0 0.0
    %479 = vmatpush1.msra.mxu0 0.0
    %480 = vmatprep.subr.mxu0 0.0
    %481 = vmatpush1.msra.mxu0 0.0
    %482 = vmatprep.subr.mxu0 0.0
    %483 = vmatpush1.msra.mxu0 0.0
    %484 = vmatprep.subr.mxu0 0.0
    %485 = vmatpush1.msra.mxu0 0.0
    %486 = vmatprep.subr.mxu0 0.0
    %487 = vmatpush1.msra.mxu0 0.0
    %488 = vmatprep.subr.mxu0 0.0
    %489 = vmatpush1.msra.mxu0 0.0
    %490 = vmatprep.mubr.f32.mxu0 0.0
    %491 = vmatmul.mubr.f32.gmra.mrb[0].mxu0 %v424
    %v492 = vpop.f32.mrb[0].mxu0
    %v493 = vadd.f32 0.0, %v492
    %v494 = vpop.f32.mrb[0].mxu0
    %495 = vdwg.mxu0
    %v496 = vadd.f32 %v219, %v493
    %vm497 = vcmp.ge.f32.partialorder %v496, 0.0
    %v498 = vmul.f32 %v496, 0.01
    %v499 = vsel %vm497, %v496, %v498
    %v500 = vld [vmem:[%s7] sm:$0xff]
    %v501 = vld [vmem:[%s7 + $0x8] sm:$0xff]
    %v502 = vld [vmem:[%s10] sm:$0x1]
    %v504 = vlaneseq
    %v505 = vshrl.u32 %v504, 7
    %v506 = vsub.s32 0, %v505
    %v507 = vrot.slane %v502, %v506
    %v510 = vsel %vm422, %v499, 0
    %512 = vmatprep.subr.mxu0 0.0
    %513 = vmatpush1.msra.mxu0 %v500
    %514 = vmatprep.subr.mxu0 0.0
    %515 = vmatpush1.msra.mxu0 %v501
    %516 = vmatprep.subr.mxu0 0.0
    %517 = vmatpush1.msra.mxu0 0.0
    %518 = vmatprep.subr.mxu0 0.0
    %519 = vmatpush1.msra.mxu0 0.0
    %520 = vmatprep.subr.mxu0 0.0
    %521 = vmatpush1.msra.mxu0 0.0
    %522 = vmatprep.subr.mxu0 0.0
    %523 = vmatpush1.msra.mxu0 0.0
    %524 = vmatprep.subr.mxu0 0.0
    %525 = vmatpush1.msra.mxu0 0.0
    %526 = vmatprep.subr.mxu0 0.0
    %527 = vmatpush1.msra.mxu0 0.0
    %528 = vmatprep.subr.mxu0 0.0
    %529 = vmatpush1.msra.mxu0 0.0
    %530 = vmatprep.subr.mxu0 0.0
    %531 = vmatpush1.msra.mxu0 0.0
    %532 = vmatprep.subr.mxu0 0.0
    %533 = vmatpush1.msra.mxu0 0.0
    %534 = vmatprep.subr.mxu0 0.0
    %535 = vmatpush1.msra.mxu0 0.0
    %536 = vmatprep.subr.mxu0 0.0
    %537 = vmatpush1.msra.mxu0 0.0
    %538 = vmatprep.subr.mxu0 0.0
    %539 = vmatpush1.msra.mxu0 0.0
    %540 = vmatprep.subr.mxu0 0.0
    %541 = vmatpush1.msra.mxu0 0.0
    %542 = vmatprep.subr.mxu0 0.0
    %543 = vmatpush1.msra.mxu0 0.0
    %544 = vmatprep.subr.mxu0 0.0
    %545 = vmatpush1.msra.mxu0 0.0
    %546 = vmatprep.subr.mxu0 0.0
    %547 = vmatpush1.msra.mxu0 0.0
    %548 = vmatprep.subr.mxu0 0.0
    %549 = vmatpush1.msra.mxu0 0.0
    %550 = vmatprep.subr.mxu0 0.0
    %551 = vmatpush1.msra.mxu0 0.0
    %552 = vmatprep.subr.mxu0 0.0
    %553 = vmatpush1.msra.mxu0 0.0
    %554 = vmatprep.subr.mxu0 0.0
    %555 = vmatpush1.msra.mxu0 0.0
    %556 = vmatprep.subr.mxu0 0.0
    %557 = vmatpush1.msra.mxu0 0.0
    %558 = vmatprep.subr.mxu0 0.0
    %559 = vmatpush1.msra.mxu0 0.0
    %560 = vmatprep.subr.mxu0 0.0
    %561 = vmatpush1.msra.mxu0 0.0
    %562 = vmatprep.subr.mxu0 0.0
    %563 = vmatpush1.msra.mxu0 0.0
    %564 = vmatprep.subr.mxu0 0.0
    %565 = vmatpush1.msra.mxu0 0.0
    %566 = vmatprep.subr.mxu0 0.0
    %567 = vmatpush1.msra.mxu0 0.0
    %568 = vmatprep.subr.mxu0 0.0
    %569 = vmatpush1.msra.mxu0 0.0
    %570 = vmatprep.subr.mxu0 0.0
    %571 = vmatpush1.msra.mxu0 0.0
    %572 = vmatprep.subr.mxu0 0.0
    %573 = vmatpush1.msra.mxu0 0.0
    %574 = vmatprep.subr.mxu0 0.0
    %575 = vmatpush1.msra.mxu0 0.0
    %576 = vmatprep.mubr.f32.mxu0 0.0
    %577 = vmatmul.mubr.f32.gmra.mrb[0].mxu0 %v510
    %v578 = vpop.f32.mrb[0].mxu0
    %v579 = vadd.f32 %v507, %v578
    %v580 = vpop.f32.mrb[0].mxu0
    %581 = vdwg.mxu0
    %583 = vrot.lane.b32.xlu0 %v579, 16
    %v584 = vpop.permute.xlu0 %583
    %v586 = vsel %vm422, %v419, %v584
    %vm587 = vcmask 195584
    %v588 = vsel %vm587, %v586, 0.0
    %589 = vst [vmem:[#allocation2] sm:$0x3] %v588
    // Predicated region
    $region46: #{tpu_custom_call.1} parent=1 // pred_check
      _
    $region47: #{tpu_custom_call.1} parent=1 // pred_check_branch
      %591 = sbr.rel (0) target = $region49
    $region48: #{tpu_custom_call.1} parent=1 // pred_region
      %s593 = ssub.s32 32, 32
      %594 = vsyncadd [#allocation3], %s593
      %s596 = sshll.u32 [#allocation2], 4
      %s597 = int_to_ptr.vmem [resolvable:$true] %s596
      %599 = dma.vmem_to_hbm [thread:$0]  %s597, 32, %s11, [#allocation3]
    $region49: #{tpu_custom_call.1} parent=1 // pred_fallthru
      _
    // Predicated region
    $region50: #{tpu_custom_call.1} parent=1 // pred_check
      _
    $region51: #{tpu_custom_call.1} parent=1 // pred_check_branch
      %601 = sbr.rel (0) target = $region53
    $region52: #{tpu_custom_call.1} parent=1 // pred_region
      %602 = dma.done [#allocation3], 32
    $region53: #{tpu_custom_call.1} parent=1 // pred_fallthru
      _
    %603 = vsyncpa [#allocation3], 1

</llo_original>
